<compile_context>
chip_gen: v7x
topology: tpu7x:2x2x1
jax: 0.10.0
libtpu: 0.0.40
codegen_flags: <defaults>
</compile_context>

<pallas_src>
import numpy as np
import jax
import jax.numpy as jnp
from jax import lax
from jax.experimental import pallas as pl
from jax.experimental.pallas import tpu as pltpu

DPAD = 128      # lane width of the block-diagonal weight / output
ROWS_PAD = 8    # sublane-aligned number of output rows (2*B padded up to 8)


# ---------------------------------------------------------------------------
# Fused kernel: sum-pool both modalities -> vreg-built block-diagonal LHS ->
#               single K=128 MXU matmul -> per-row L2 normalize -> one dense store.
# ---------------------------------------------------------------------------
def _clip_fused_kernel(x_img_ref, x_txt_ref, w_ref, o_ref):
    """
    x_img_ref : (B, S_img, PDIM) f32   unpadded image patch sequence
    x_txt_ref : (B, L,     EDIM) f32   unpadded token-embedding sequence
    w_ref     : (DPAD, DPAD)   bf16    block-diag [w_img/S_img ; w_txt/L] projection
    o_ref     : (ROWS_PAD, DPAD) f32   rows 0..B-1 = image, B..2B-1 = text, rest 0
    """
    B, _, pdim = x_img_ref.shape
    _, _, edim = x_txt_ref.shape
    rows_pad, dpad = o_ref.shape

    # --- pooling: plain sums; the 1/S_img and 1/L mean scales are folded into
    #     the weight blocks at init (they commute through the block-diagonal
    #     matmul), so no broadcast-multiply here.
    img_pooled = jnp.sum(x_img_ref[...], axis=1)          # (B, PDIM) f32
    txt_pooled = jnp.sum(x_txt_ref[...], axis=1)          # (B, EDIM) f32

    # --- build the stacked block-diagonal LHS entirely in vregs (no VMEM
    #     scratch, no masked partial stores, no write-then-reload round trip):
    #     rows 0..B-1  : [ img_pooled | 0 ]            (lanes 0:PDIM)
    #     rows B..2B-1 : [ 0 | txt_pooled | 0 ]        (lanes PDIM:PDIM+EDIM)
    #     rows 2B..7   : 0   (so the output store is a full unmasked 8x128 vst)
    img_rows = jnp.concatenate(
        [img_pooled, jnp.zeros((B, dpad - pdim), jnp.float32)], axis=1)
    txt_rows = jnp.concatenate(
        [jnp.zeros((B, pdim), jnp.float32), txt_pooled,
         jnp.zeros((B, dpad - pdim - edim), jnp.float32)], axis=1)
    stacked = jnp.concatenate(
        [img_rows, txt_rows,
         jnp.zeros((rows_pad - 2 * B, dpad), jnp.float32)], axis=0)

    # --- single K=128 MXU matmul: bf16 operands, f32 accumulation -------------
    feat = jnp.dot(stacked.astype(jnp.bfloat16), w_ref[...],
                   preferred_element_type=jnp.float32)     # (ROWS_PAD, DPAD)

    # --- fused L2 normalize: x * rsqrt(max(||x||^2, 1e-24))
    #     == x / max(||x||, 1e-12)  (F.normalize semantics); zero pad rows stay 0.
    sq = jnp.sum(feat * feat, axis=-1, keepdims=True)
    inv = lax.rsqrt(jnp.maximum(sq, 1e-24))
    o_ref[...] = (feat * inv).astype(o_ref.dtype)          # one full (8,128) store


def clip_fused_encode(x_img, x_txt, w_comb):
    B, S_img, pdim = x_img.shape
    B2, L, edim = x_txt.shape
    assert B == B2 and 2 * B <= ROWS_PAD, "increase ROWS_PAD (holds both modalities)"
    assert w_comb.shape == (DPAD, DPAD) and pdim + edim <= DPAD
    return pl.pallas_call(
        _clip_fused_kernel,
        out_shape=jax.ShapeDtypeStruct((ROWS_PAD, DPAD), jnp.float32),
        grid=(1,),
        in_specs=[pl.BlockSpec((B, S_img, pdim), lambda i: (0, 0, 0)),
                  pl.BlockSpec((B, L, edim), lambda i: (0, 0, 0)),
                  pl.BlockSpec((DPAD, DPAD), lambda i: (0, 0))],
        out_specs=pl.BlockSpec((ROWS_PAD, DPAD), lambda i: (0, 0)),
        compiler_params=pltpu.CompilerParams(dimension_semantics=("arbitrary",)),
    )(x_img, x_txt, w_comb)


# ---------------------------------------------------------------------------
# CLIP module (effective forward path only)
# ---------------------------------------------------------------------------
class CLIPPallas:
    def __init__(self, key, embed_dim=32, channels=3, patch=4,
                 vocab_size=64, seq_len=8, img_size=16):
        self.embed_dim = embed_dim
        self.patch = patch
        self.seq_len = seq_len
        self.vocab_size = vocab_size
        self.img_size = img_size
        self.s_img = (img_size // patch) * (img_size // patch)
        # nn.init.constant_(logit_scale, np.log(1/0.07)) -- present but unused on the
        # executed return path of forward().
        self.logit_scale = jnp.asarray(np.log(1.0 / 0.07), jnp.float32)

        k1, k2, k3 = jax.random.split(key, 3)
        patch_dim = channels * patch * patch
        assert patch_dim + embed_dim <= DPAD
        self.patch_dim = patch_dim
        self.w_img = 0.02 * jax.random.normal(k1, (patch_dim, embed_dim), jnp.float32)
        self.tok_emb = 0.02 * jax.random.normal(k2, (vocab_size, embed_dim), jnp.float32)
        self.w_txt = 0.02 * jax.random.normal(k3, (embed_dim, embed_dim), jnp.float32)

        # Block-diagonal combined projection, K=128, mean scales folded in:
        #   rows [0:patch_dim]                     -> w_img / S_img  (image block)
        #   rows [patch_dim:patch_dim+embed_dim]   -> w_txt / L      (text  block)
        w_comb = jnp.zeros((DPAD, DPAD), jnp.float32)
        w_comb = w_comb.at[0:patch_dim, 0:embed_dim].set(self.w_img / float(self.s_img))
        w_comb = w_comb.at[patch_dim:patch_dim + embed_dim, 0:embed_dim].set(
            self.w_txt / float(seq_len))
        self.w_comb = w_comb.astype(jnp.bfloat16)
        # TODO(synk): ss / id / mlm branches (simclr_mlp, classifier, cross-modal
        # transformer, mlm_head) are constructed in __init__ but are dead code on the
        # executed forward path, so they are not materialized here.

    # ---- plain-JAX glue (layout only; no hot-path compute, no HBM zero-padding) ----
    def _image_patches(self, images):
        # NCHW -> (B, (H/p)*(W/p), C*p*p); last dim stays unpadded (48 lanes)
        B, C, H, W = images.shape
        p = self.patch
        x = images.reshape(B, C, H // p, p, W // p, p)
        return x.transpose(0, 2, 4, 1, 3, 5).reshape(B, (H // p) * (W // p), C * p * p)

    def _text_embeddings(self, tokens):
        # token-embedding table lookup (glue gather); last dim stays unpadded (32)
        # TODO(synk): at real shapes, fuse this gather into the kernel pipeline via
        # PrefetchScalarGridSpec scalar-prefetched token ids + row gather from HBM.
        return jnp.take(self.tok_emb, tokens, axis=0)      # (B, L, embed_dim)

    def all_gather(self, x):
        # use_gather / distributed not active in this setup -> identity
        return x

    def forward(self, images, text_tokens, alpha=0.4):
        # TODO(synk): EDA random_deletion / back-translation / tokenize() are Python
        # string ops with no Pallas equivalent; tokens are supplied directly.
        B = images.shape[0]
        x_img = self._image_patches(images)
        x_txt = self._text_embeddings(text_tokens)
        out = clip_fused_encode(x_img, x_txt, self.w_comb)        # (8, 128) normalized
        image_features_norm = out[0:B, 0:self.embed_dim]
        text_features_norm = out[B:2 * B, 0:self.embed_dim]
        image_features_norm_gathered = self.all_gather(image_features_norm)
        text_features_norm_gathered = self.all_gather(text_features_norm)
        return image_features_norm_gathered, text_features_norm_gathered

    # ---- pure-JAX f32 reference of the same effective forward path ----------------
    def reference_forward(self, images, text_tokens):
        x_img = self._image_patches(images)
        x_txt = self._text_embeddings(text_tokens)
        feat_i = jnp.mean(x_img, axis=1) @ self.w_img
        feat_t = jnp.mean(x_txt, axis=1) @ self.w_txt

        def l2n(v):  # F.normalize(eps=1e-12)
            return v / jnp.maximum(jnp.linalg.norm(v, axis=-1, keepdims=True), 1e-12)
        return l2n(feat_i), l2n(feat_t)


# ---------------------------------------------------------------------------
if __name__ == "__main__":
    key = jax.random.PRNGKey(0)
    k_img, k_tok, k_param = jax.random.split(key, 3)

    B, C, H, W = 2, 3, 16, 16
    L = 8

    images = jax.random.normal(k_img, (B, C, H, W), jnp.float32)
    tokens = jax.random.randint(k_tok, (B, L), 0, 64, jnp.int32)

    model = CLIPPallas(k_param, embed_dim=32, channels=C, patch=4,
                       vocab_size=64, seq_len=L, img_size=H)

    img_n, txt_n = model.forward(images, tokens, alpha=0.4)
    img_n = jax.block_until_ready(img_n)
    txt_n = jax.block_until_ready(txt_n)

    # sanity: shapes, finiteness, unit row norms (F.normalize semantics)
    assert img_n.shape == (B, 32) and txt_n.shape == (B, 32)
    assert np.all(np.isfinite(np.asarray(img_n))) and np.all(np.isfinite(np.asarray(txt_n)))
    assert np.allclose(np.linalg.norm(np.asarray(img_n), axis=1), 1.0, atol=1e-5)
    assert np.allclose(np.linalg.norm(np.asarray(txt_n), axis=1), 1.0, atol=1e-5)

    # correctness vs pure-JAX f32 reference (tolerance covers bf16 MXU operands;
    # accumulation is f32 and all normalize math is f32)
    img_ref, txt_ref = model.reference_forward(images, tokens)
    assert np.allclose(np.asarray(img_n), np.asarray(img_ref), atol=2e-2), \
        np.max(np.abs(np.asarray(img_n) - np.asarray(img_ref)))
    assert np.allclose(np.asarray(txt_n), np.asarray(txt_ref), atol=2e-2), \
        np.max(np.abs(np.asarray(txt_n) - np.asarray(txt_ref)))

    print("KERNEL_OK")
</pallas_src>

<mosaic_0001>
module attributes {stable_mosaic.version = 11 : i64} {
  func.func @_clip_fused_kernel(%arg0: i32, %arg1: memref<2x16x48xf32, #tpu.memory_space<vmem>>, %arg2: memref<2x8x32xf32, #tpu.memory_space<vmem>>, %arg3: memref<128x128xbf16, #tpu.memory_space<vmem>>, %arg4: memref<8x128xf32, #tpu.memory_space<vmem>>) attributes {dimension_semantics = [#tpu.dimension_semantics<arbitrary>], iteration_bounds = array<i64: 1>, scalar_prefetch = 0 : i64, scratch_operands = 0 : i64, tpu.core_type = #tpu.core_type<tc>, window_params = [{pipeline_mode = #tpu.pipeline_mode<synchronous>, transform_indices = @transform_0, window_bounds = array<i64: 2, 16, 48>}, {pipeline_mode = #tpu.pipeline_mode<synchronous>, transform_indices = @transform_1, window_bounds = array<i64: 2, 8, 32>}, {pipeline_mode = #tpu.pipeline_mode<synchronous>, transform_indices = @transform_2, window_bounds = array<i64: 128, 128>}, {pipeline_mode = #tpu.pipeline_mode<synchronous>, transform_indices = @transform_3, window_bounds = array<i64: 8, 128>}]} {
    %c0 = arith.constant 0 : index
    %c0_0 = arith.constant 0 : index
    %c0_1 = arith.constant 0 : index
    %0 = vector.load %arg1[%c0, %c0_0, %c0_1] : memref<2x16x48xf32, #tpu.memory_space<vmem>>, vector<2x16x48xf32>
    %cst = arith.constant dense<0.000000e+00> : vector<2x48xf32>
    %1 = vector.multi_reduction <add>, %0, %cst [1] : vector<2x16x48xf32> to vector<2x48xf32>
    %c0_2 = arith.constant 0 : index
    %c0_3 = arith.constant 0 : index
    %c0_4 = arith.constant 0 : index
    %2 = vector.load %arg2[%c0_2, %c0_3, %c0_4] : memref<2x8x32xf32, #tpu.memory_space<vmem>>, vector<2x8x32xf32>
    %cst_5 = arith.constant dense<0.000000e+00> : vector<2x32xf32>
    %3 = vector.multi_reduction <add>, %2, %cst_5 [1] : vector<2x8x32xf32> to vector<2x32xf32>
    %cst_6 = arith.constant 0.000000e+00 : f32
    %4 = vector.broadcast %cst_6 : f32 to vector<2x80xf32>
    %5 = tpu.concatenate %1, %4 in 1 : vector<2x48xf32>, vector<2x80xf32> -> vector<2x128xf32>
    %cst_7 = arith.constant 0.000000e+00 : f32
    %6 = vector.broadcast %cst_7 : f32 to vector<2x48xf32>
    %cst_8 = arith.constant 0.000000e+00 : f32
    %7 = vector.broadcast %cst_8 : f32 to vector<2x48xf32>
    %8 = tpu.concatenate %6, %3, %7 in 1 : vector<2x48xf32>, vector<2x32xf32>, vector<2x48xf32> -> vector<2x128xf32>
    %cst_9 = arith.constant 0.000000e+00 : f32
    %9 = vector.broadcast %cst_9 : f32 to vector<4x128xf32>
    %10 = tpu.concatenate %5, %8, %9 in 0 : vector<2x128xf32>, vector<2x128xf32>, vector<4x128xf32> -> vector<8x128xf32>
    %11 = arith.truncf %10 : vector<8x128xf32> to vector<8x128xbf16>
    %c0_10 = arith.constant 0 : index
    %c0_11 = arith.constant 0 : index
    %12 = vector.load %arg3[%c0_10, %c0_11] : memref<128x128xbf16, #tpu.memory_space<vmem>>, vector<128x128xbf16>
    %cst_12 = arith.constant dense<0.000000e+00> : vector<8x128xf32>
    %13 = tpu.matmul %11, %12, %cst_12 {dimension_numbers = #tpu.dot_dimension_numbers<[1], [0], [0], [1], [0, 0, 1, 1], [], []>} : vector<8x128xbf16>, vector<128x128xbf16>, vector<8x128xf32> -> vector<8x128xf32>
    %14 = arith.mulf %13, %13 : vector<8x128xf32>
    %cst_13 = arith.constant dense<0.000000e+00> : vector<8xf32>
    %15 = vector.multi_reduction <add>, %14, %cst_13 [1] : vector<8x128xf32> to vector<8xf32>
    %16 = vector.shape_cast %15 : vector<8xf32> to vector<8x1xf32>
    %cst_14 = arith.constant 1.000000e-24 : f32
    %17 = vector.broadcast %cst_14 : f32 to vector<8x1xf32>
    %18 = arith.maximumf %16, %17 : vector<8x1xf32>
    %19 = math.rsqrt %18 : vector<8x1xf32>
    %20 = vector.broadcast %19 : vector<8x1xf32> to vector<8x128xf32>
    %21 = arith.mulf %13, %20 : vector<8x128xf32>
    %c0_15 = arith.constant 0 : index
    %c0_16 = arith.constant 0 : index
    %22 = vector.load %arg4[%c0_15, %c0_16] : memref<8x128xf32, #tpu.memory_space<vmem>>, vector<8x128xf32>
    tpu.vector_store %arg4[%c0_15, %c0_16], %21 {strides = array<i32>} : memref<8x128xf32, #tpu.memory_space<vmem>>, vector<8x128xf32>,
    return
  }
  func.func @transform_0(%arg0: i32) -> (i32, i32, i32) {
    %c0_i32 = arith.constant 0 : i32
    %c0_i32_0 = arith.constant 0 : i32
    %c0_i32_1 = arith.constant 0 : i32
    %c0_i32_2 = arith.constant 0 : i32
    return %c0_i32, %c0_i32_0, %c0_i32_1 : i32, i32, i32
  }
  func.func @transform_1(%arg0: i32) -> (i32, i32, i32) {
    %c0_i32 = arith.constant 0 : i32
    %c0_i32_0 = arith.constant 0 : i32
    %c0_i32_1 = arith.constant 0 : i32
    %c0_i32_2 = arith.constant 0 : i32
    return %c0_i32, %c0_i32_0, %c0_i32_1 : i32, i32, i32
  }
  func.func @transform_2(%arg0: i32) -> (i32, i32) {
    %c0_i32 = arith.constant 0 : i32
    %c0_i32_0 = arith.constant 0 : i32
    %c0_i32_1 = arith.constant 0 : i32
    return %c0_i32, %c0_i32_0 : i32, i32
  }
  func.func @transform_3(%arg0: i32) -> (i32, i32) {
    %c0_i32 = arith.constant 0 : i32
    %c0_i32_0 = arith.constant 0 : i32
    %c0_i32_1 = arith.constant 0 : i32
    return %c0_i32, %c0_i32_0 : i32, i32
  }
}

</mosaic_0001>

<llo_original>
// kernel: tpu_custom_call.1
$region0: #{tpu_custom_call.1}
  #allocation0 [shape = 'u32[]', space=smem, size = 0x4, offset = 0x4, fixed_abs, tag = 'smem constant byte address 0x4 - core index']
  #allocation1 [shape = 'u32[144,128]{1,0:T(1,128)}', space=vmem, size = 0x12000, scoped, tag = 'internal scratch']
  %s0 = inlined_call_operand.hbm [shape: f32[2,16,48], index: 0, kind: input, shape index: {}]
  %s1 = inlined_call_operand.hbm [shape: f32[2,8,32], index: 1, kind: input, shape index: {}]
  %s2 = inlined_call_operand.hbm [shape: bf16[128,128], index: 2, kind: input, shape index: {}]
  %s3 = inlined_call_operand.hbm [shape: f32[8,128], index: 3, kind: output, shape index: {}]
  %s4 = sld [smem:[#allocation0]]
  $region34: #{tpu_custom_call.1} parent=0
    _
  %s6 = ssub.s32 1, %s4
  %s7 = scalar_select 0, %s6, %s4
  $region1: #{tpu_custom_call.1} parent=0
    #allocation2 [shape = 'u8[16384]{0}', space=vmem, size = 0x4000, scoped, tag = 'input window, operand 0, single buffered']
    #allocation3 [shape = 's32[1]{0}', space=sflag, size = 0x4, scoped, tag = 'scoped memory for tpu_custom_call.1']
    #allocation4 [shape = 's32[1]{0}', space=sflag, size = 0x4, scoped, tag = 'scoped memory for tpu_custom_call.1']
    #allocation5 [shape = 'u8[8192]{0}', space=vmem, size = 0x2000, scoped, tag = 'input window, operand 1, single buffered']
    #allocation6 [shape = 's32[1]{0}', space=sflag, size = 0x4, scoped, tag = 'scoped memory for tpu_custom_call.1']
    #allocation7 [shape = 'u8[32768]{0}', space=vmem, size = 0x8000, scoped, tag = 'input window, operand 2, single buffered']
    #allocation8 [shape = 'u8[4096]{0}', space=vmem, size = 0x1000, scoped, tag = 'output window, operand 0, single buffered']
    %8 = vsyncpa [#allocation3], 0
    %9 = vsyncpa [#allocation6], 0
    %10 = vsyncpa [#allocation4], 0
    // Predicated region
    $region2: #{tpu_custom_call.1} parent=1 // pred_check
      _
    $region3: #{tpu_custom_call.1} parent=1 // pred_check_branch
      %12 = sbr.rel (0) target = $region5
    $region4: #{tpu_custom_call.1} parent=1 // pred_region
      %s14 = ssub.s32 512, 512
      %15 = vsyncadd [#allocation3], %s14
      %s16 = sshll.u32 [#allocation2], 4
      %s17 = int_to_ptr.vmem [resolvable:$true] %s16
      %22 = dma.hbm_to_vmem [thread:$0]  %s0, 512, %s17, [#allocation3], 128, 128, 8
    $region5: #{tpu_custom_call.1} parent=1 // pred_fallthru
      _
    // Predicated region
    $region6: #{tpu_custom_call.1} parent=1 // pred_check
      _
    $region7: #{tpu_custom_call.1} parent=1 // pred_check_branch
      %24 = sbr.rel (0) target = $region9
    $region8: #{tpu_custom_call.1} parent=1 // pred_region
      %s26 = ssub.s32 256, 256
      %27 = vsyncadd [#allocation6], %s26
      %s28 = sshll.u32 [#allocation5], 4
      %s29 = int_to_ptr.vmem [resolvable:$true] %s28
      %34 = dma.hbm_to_vmem [thread:$0]  %s1, 256, %s29, [#allocation6], 128, 128, 8
    $region9: #{tpu_custom_call.1} parent=1 // pred_fallthru
      _
    // Predicated region
    $region10: #{tpu_custom_call.1} parent=1 // pred_check
      _
    $region11: #{tpu_custom_call.1} parent=1 // pred_check_branch
      %36 = sbr.rel (0) target = $region13
    $region12: #{tpu_custom_call.1} parent=1 // pred_region
      %s38 = ssub.s32 1024, 1024
      %39 = vsyncadd [#allocation6], %s38
      %s40 = sshll.u32 [#allocation7], 4
      %s41 = int_to_ptr.vmem [resolvable:$true] %s40
      %46 = dma.hbm_to_vmem [thread:$0]  %s2, 1024, %s41, [#allocation6], 64, 64, 4
    $region13: #{tpu_custom_call.1} parent=1 // pred_fallthru
      _
    // Predicated region
    $region14: #{tpu_custom_call.1} parent=1 // pred_check
      _
    $region15: #{tpu_custom_call.1} parent=1 // pred_check_branch
      %48 = sbr.rel (0) target = $region17
    $region16: #{tpu_custom_call.1} parent=1 // pred_region
      %49 = dma.done [#allocation3], 512
    $region17: #{tpu_custom_call.1} parent=1 // pred_fallthru
      _
    // Predicated region
    $region18: #{tpu_custom_call.1} parent=1 // pred_check
      _
    $region19: #{tpu_custom_call.1} parent=1 // pred_check_branch
      %51 = sbr.rel (0) target = $region21
    $region20: #{tpu_custom_call.1} parent=1 // pred_region
      %52 = dma.done [#allocation6], 256
    $region21: #{tpu_custom_call.1} parent=1 // pred_fallthru
      _
    // Predicated region
    $region22: #{tpu_custom_call.1} parent=1 // pred_check
      _
    $region23: #{tpu_custom_call.1} parent=1 // pred_check_branch
      %54 = sbr.rel (0) target = $region25
    $region24: #{tpu_custom_call.1} parent=1 // pred_region
      %55 = dma.done [#allocation6], 1024
    $region25: #{tpu_custom_call.1} parent=1 // pred_fallthru
      _
    %v57 = vld [vmem:[#allocation2] sm:$0xff]
    %v58 = vld [vmem:[#allocation2 + $0x8] sm:$0xff]
    %v59 = vld [vmem:[#allocation2 + $0x10] sm:$0xff]
    %v60 = vld [vmem:[#allocation2 + $0x18] sm:$0xff]
    %vm61 = vcmask 392192
    %v62 = vsel %vm61, %v57, 0.0
    %v63 = vsel %vm61, %v58, 0.0
    %v64 = vadd.f32 %v62, %v63
    %v65 = vrot.slane %v64, 4
    %v66 = vadd.f32 %v64, %v65
    %v67 = vrot.slane %v66, 2
    %v68 = vadd.f32 %v66, %v67
    %v69 = vrot.slane %v68, 1
    %v70 = vadd.f32 %v68, %v69
    %v71 = vsel %vm61, %v59, 0.0
    %v72 = vsel %vm61, %v60, 0.0
    %v73 = vadd.f32 %v71, %v72
    %v74 = vrot.slane %v73, 4
    %v75 = vadd.f32 %v73, %v74
    %v76 = vrot.slane %v75, 2
    %v77 = vadd.f32 %v75, %v76
    %v78 = vrot.slane %v77, 1
    %v79 = vadd.f32 %v77, %v78
    %v80 = vld [vmem:[#allocation5] sm:$0xff]
    %v81 = vld [vmem:[#allocation5 + $0x8] sm:$0xff]
    %vm82 = vcmask 261120
    %v83 = vsel %vm82, %v80, 0.0
    %v84 = vrot.slane %v83, 4
    %v85 = vadd.f32 %v83, %v84
    %v86 = vrot.slane %v85, 2
    %v87 = vadd.f32 %v85, %v86
    %v88 = vrot.slane %v87, 1
    %v89 = vadd.f32 %v87, %v88
    %v90 = vsel %vm82, %v81, 0.0
    %v91 = vrot.slane %v90, 4
    %v92 = vadd.f32 %v90, %v91
    %v93 = vrot.slane %v92, 2
    %v94 = vadd.f32 %v92, %v93
    %v95 = vrot.slane %v94, 1
    %v96 = vadd.f32 %v94, %v95
    %vm99 = vcmask 1041409
    %v100 = vsel %vm99, %v79, %v70
    %v102 = vsel %vm61, %v100, 0.0
    %v105 = vsel %vm99, %v96, %v89
    %106 = vrot.lane.b32.xlu0 %v105, 48
    %v107 = vpop.permute.xlu0 %106
    %v109 = vsel %vm61, 0.0, %v107
    %vm110 = vcmask 654336
    %v111 = vsel %vm110, %v109, 0.0
    %v113 = vrot.slane %v111, 6
    %vm115 = vcmask 1041408
    %v116 = vsel %vm115, %v102, %v113
    %vm117 = vcmask 1043456
    %v118 = vsel %vm117, %v116, 0.0
    %v119 = vpack.c.bf16 %v118, %v118
    %v120 = vld [vmem:[#allocation7] sm:$0xf]
    %v121 = vld [vmem:[#allocation7 + $0x4] sm:$0xf]
    %v122 = vld [vmem:[#allocation7 + $0x8] sm:$0xf]
    %v123 = vld [vmem:[#allocation7 + $0xc] sm:$0xf]
    %v124 = vld [vmem:[#allocation7 + $0x10] sm:$0xf]
    %v125 = vld [vmem:[#allocation7 + $0x14] sm:$0xf]
    %v126 = vld [vmem:[#allocation7 + $0x18] sm:$0xf]
    %v127 = vld [vmem:[#allocation7 + $0x1c] sm:$0xf]
    %v128 = vld [vmem:[#allocation7 + $0x20] sm:$0xf]
    %v129 = vld [vmem:[#allocation7 + $0x24] sm:$0xf]
    %v130 = vld [vmem:[#allocation7 + $0x28] sm:$0xf]
    %v131 = vld [vmem:[#allocation7 + $0x2c] sm:$0xf]
    %v132 = vld [vmem:[#allocation7 + $0x30] sm:$0xf]
    %v133 = vld [vmem:[#allocation7 + $0x34] sm:$0xf]
    %v134 = vld [vmem:[#allocation7 + $0x38] sm:$0xf]
    %v135 = vld [vmem:[#allocation7 + $0x3c] sm:$0xf]
    %v152 = vunpack.c.l.b16 %v120
    %v153 = vunpack.c.l.b16 %v121
    %v154 = vunpack.c.l.b16 %v122
    %v155 = vunpack.c.l.b16 %v123
    %v156 = vunpack.c.l.b16 %v124
    %v157 = vunpack.c.l.b16 %v125
    %v158 = vunpack.c.l.b16 %v126
    %v159 = vunpack.c.l.b16 %v127
    %v160 = vunpack.c.l.b16 %v128
    %v161 = vunpack.c.l.b16 %v129
    %v162 = vunpack.c.l.b16 %v130
    %v163 = vunpack.c.l.b16 %v131
    %v164 = vunpack.c.l.b16 %v132
    %v165 = vunpack.c.l.b16 %v133
    %v166 = vunpack.c.l.b16 %v134
    %v167 = vunpack.c.l.b16 %v135
    %v168 = vpack.c.b16 %v153, %v152
    %v169 = vpack.c.b16 %v155, %v154
    %v170 = vpack.c.b16 %v157, %v156
    %v171 = vpack.c.b16 %v159, %v158
    %v172 = vpack.c.b16 %v161, %v160
    %v173 = vpack.c.b16 %v163, %v162
    %v174 = vpack.c.b16 %v165, %v164
    %v175 = vpack.c.b16 %v167, %v166
    %184 = vmatprep.subr.bf16.mxu0 0
    %185 = vmatpush1.bf16.msra.mxu0 %v168
    %186 = vmatprep.subr.bf16.mxu0 0
    %187 = vmatpush1.bf16.msra.mxu0 %v169
    %188 = vmatprep.subr.bf16.mxu0 0
    %189 = vmatpush1.bf16.msra.mxu0 %v170
    %190 = vmatprep.subr.bf16.mxu0 0
    %191 = vmatpush1.bf16.msra.mxu0 %v171
    %192 = vmatprep.subr.bf16.mxu0 0
    %193 = vmatpush1.bf16.msra.mxu0 %v172
    %194 = vmatprep.subr.bf16.mxu0 0
    %195 = vmatpush1.bf16.msra.mxu0 %v173
    %196 = vmatprep.subr.bf16.mxu0 0
    %197 = vmatpush1.bf16.msra.mxu0 %v174
    %198 = vmatprep.subr.bf16.mxu0 0
    %199 = vmatpush1.bf16.msra.mxu0 %v175
    %200 = vmatprep.subr.bf16.mxu0 0
    %201 = vmatpush1.bf16.msra.mxu0 0
    %202 = vmatprep.subr.bf16.mxu0 0
    %203 = vmatpush1.bf16.msra.mxu0 0
    %204 = vmatprep.subr.bf16.mxu0 0
    %205 = vmatpush1.bf16.msra.mxu0 0
    %206 = vmatprep.subr.bf16.mxu0 0
    %207 = vmatpush1.bf16.msra.mxu0 0
    %208 = vmatprep.subr.bf16.mxu0 0
    %209 = vmatpush1.bf16.msra.mxu0 0
    %210 = vmatprep.subr.bf16.mxu0 0
    %211 = vmatpush1.bf16.msra.mxu0 0
    %212 = vmatprep.subr.bf16.mxu0 0
    %213 = vmatpush1.bf16.msra.mxu0 0
    %214 = vmatprep.subr.bf16.mxu0 0
    %215 = vmatpush1.bf16.msra.mxu0 0
    %216 = vmatprep.mubr.bf16.mxu0 0
    %217 = vmatmul.mubr.bf16.gmra.mrb[0].mxu0 %v119
    %v218 = vpop.f32.mrb[0].mxu0
    %v219 = vadd.f32 0.0, %v218
    %v220 = vpop.f32.mrb[0].mxu0
    %v221 = vpop.f32.mrb[0].mxu0
    %v222 = vpop.f32.mrb[0].mxu0
    %223 = vdwg.mxu0
    %v224 = vmul.f32 %v219, %v219
    %225 = vadd.xlane.f32.xlu0 %v224
    %v226 = vpop.xlane.xlu0 %225
    %v227 = vmax.f32 %v226, 1e-24
    %v228 = vrsqrt.pop %v227
    %v229 = vmul.f32 %v219, %v228
    %230 = vst [vmem:[#allocation8] sm:$0xff] %v229
    // Predicated region
    $region26: #{tpu_custom_call.1} parent=1 // pred_check
      _
    $region27: #{tpu_custom_call.1} parent=1 // pred_check_branch
      %232 = sbr.rel (0) target = $region29
    $region28: #{tpu_custom_call.1} parent=1 // pred_region
      %s234 = ssub.s32 128, 128
      %235 = vsyncadd [#allocation4], %s234
      %s237 = sshll.u32 [#allocation8], 4
      %s238 = int_to_ptr.vmem [resolvable:$true] %s237
      %240 = dma.vmem_to_hbm [thread:$0]  %s238, 128, %s3, [#allocation4]
    $region29: #{tpu_custom_call.1} parent=1 // pred_fallthru
      _
    // Predicated region
    $region30: #{tpu_custom_call.1} parent=1 // pred_check
      _
    $region31: #{tpu_custom_call.1} parent=1 // pred_check_branch
      %242 = sbr.rel (0) target = $region33
    $region32: #{tpu_custom_call.1} parent=1 // pred_region
      %243 = dma.done [#allocation4], 128
    $region33: #{tpu_custom_call.1} parent=1 // pred_fallthru
      _
    %244 = vsyncpa [#allocation3], 1
    %245 = vsyncpa [#allocation6], 1
    %246 = vsyncpa [#allocation4], 1

</llo_original>
